<compile_context>
chip_gen: v6e
topology: v6e:2x2x1
jax: 0.10.0
libtpu: 0.0.40
codegen_flags: <defaults>
</compile_context>

<pallas_src>
import jax
import jax.numpy as jnp
from jax.experimental import pallas as pl
from jax.experimental.pallas import tpu as pltpu

_NEG_BIG = -1e30  # finite "-inf": keeps fully-masked rows NaN-free


def bahdanau_kernel(q_ref, pk_ref, v_ref, bias_ref, wq_t_ref, we_ref,
                    ctx_ref, alpha_ref):
    # q_ref:     (Bb, Hq)    queries (singleton time dim squeezed in wrapper)
    # pk_ref:    (Bb, S, H)  pre-projected keys
    # v_ref:     (Bb, S, Dv) values
    # bias_ref:  (Bb, S)     f32 additive mask bias (0 = valid, -1e30 = padded)
    # wq_t_ref:  (Hq, H)     query_layer.weight^T
    # we_ref:    (1, H)      energy_layer.weight (row vector)
    # ctx_ref:   (Bb, Dv)    context output (dense sublane/lane stores)
    # alpha_ref: (Bb, S)     attention weights output (lane-dense)

    # Single batched MXU matmul per grid step (query_layer for the whole block).
    q_proj = jnp.dot(q_ref[...], wq_t_ref[...],
                     preferred_element_type=jnp.float32)            # (Bb, H)

    e = jnp.tanh(q_proj[:, None, :] + pk_ref[...])                  # (Bb, S, H)

    # energy_layer: contract the H (lane) axis with the single output row.
    scores = jnp.sum(e * we_ref[...], axis=-1)                      # (Bb, S)
    scores = scores + bias_ref[...]                                 # additive mask

    # Softmax over the sequence axis (lanes).
    m = jnp.max(scores, axis=-1, keepdims=True)                     # (Bb, 1)
    p = jnp.exp(scores - m)                                         # (Bb, S)
    denom = jnp.sum(p, axis=-1, keepdims=True)                      # (Bb, 1)
    # Exact reciprocal keeps the 1e-5 tolerance; approx=True would move it to
    # the EUP slot if the tolerance can be relaxed.
    alphas = p * pl.reciprocal(denom, approx=False)                 # (Bb, S)

    # context = alphas @ value: VPU broadcast-multiply + sublane reduce.
    ctx = jnp.sum(alphas[:, :, None] * v_ref[...], axis=1)          # (Bb, Dv)

    ctx_ref[...] = ctx.astype(ctx_ref.dtype)
    alpha_ref[...] = alphas.astype(alpha_ref.dtype)


def _round_up(x, m):
    return -(-x // m) * m


def _choose_block_b(B, S, H, Hq, Dv):
    # f32 bytes of one batch row's worth of kernel inputs + outputs.
    row_bytes = 4 * (S * (H + Dv) + Hq + 2 * S + Dv)
    # ~4 MiB per live block keeps 2x double-buffered inputs well under the
    # 16 / 32 / 32 MiB scoped-VMEM defaults on v5e / v6e / v7x.
    vmem_cap = max(8, ((4 << 20) // max(row_bytes, 1)) // 8 * 8)
    block_b = min(128, vmem_cap)                 # 128 = MXU M dim on v5e
    if B >= 16:
        # at least 2 grid steps: v7x dual-TensorCore sharding + DMA/compute overlap
        block_b = min(block_b, _round_up(_round_up(B, 2) // 2, 8))
    block_b = min(block_b, _round_up(B, 8))      # don't exceed (padded) B
    return max(8, block_b)


def bahdanau_attention(query, proj_key, value, mask, wq, we, *, block_b=None):
    """query (B,1,Hq), proj_key (B,S,H), value (B,S,Dv), mask (B,1,S),
       wq (H,Hq) = query_layer.weight, we (1,H) = energy_layer.weight."""
    B, S, H = proj_key.shape
    Hq = query.shape[-1]
    Dv = value.shape[-1]

    if block_b is None:
        block_b = _choose_block_b(B, S, H, Hq, Dv)
    Bp = _round_up(B, block_b)
    nb = Bp // block_b

    # Squeeze singleton dims; precompute the additive mask bias in f32.
    q2 = query.reshape(B, Hq)
    bias = jnp.where(mask.reshape(B, S) == 0,
                     jnp.float32(_NEG_BIG), jnp.float32(0.0))

    if Bp != B:
        pad = Bp - B
        q2 = jnp.pad(q2, ((0, pad), (0, 0)))
        proj_key = jnp.pad(proj_key, ((0, pad), (0, 0), (0, 0)))
        value = jnp.pad(value, ((0, pad), (0, 0), (0, 0)))
        bias = jnp.pad(bias, ((0, pad), (0, 0)))  # padded rows: unmasked, finite

    wq_t = jnp.transpose(wq, (1, 0))              # (Hq, H)

    ctx, alphas = pl.pallas_call(
        bahdanau_kernel,
        out_shape=(
            jax.ShapeDtypeStruct((Bp, Dv), query.dtype),
            jax.ShapeDtypeStruct((Bp, S), jnp.float32),
        ),
        grid_spec=pltpu.PrefetchScalarGridSpec(
            num_scalar_prefetch=0,
            grid=(nb,),
            in_specs=[
                pl.BlockSpec((block_b, Hq), lambda i: (i, 0)),
                pl.BlockSpec((block_b, S, H), lambda i: (i, 0, 0)),
                pl.BlockSpec((block_b, S, Dv), lambda i: (i, 0, 0)),
                pl.BlockSpec((block_b, S), lambda i: (i, 0)),
                pl.BlockSpec((Hq, H), lambda i: (0, 0)),
                pl.BlockSpec((1, H), lambda i: (0, 0)),
            ],
            out_specs=(
                pl.BlockSpec((block_b, Dv), lambda i: (i, 0)),
                pl.BlockSpec((block_b, S), lambda i: (i, 0)),
            ),
        ),
        compiler_params=pltpu.CompilerParams(
            dimension_semantics=("parallel",),
            vmem_limit_bytes=32 * 1024 * 1024),
    )(q2, proj_key, value, bias, wq_t, we)

    # Restore the PyTorch (B,1,*) shapes and strip batch padding.
    return ctx[:B].reshape(B, 1, Dv), alphas[:B].reshape(B, 1, S)


def bahdanau_reference(query, proj_key, value, mask, wq, we):
    q = jnp.einsum("bqk,hk->bqh", query, wq)                         # query_layer
    scores = jnp.einsum("bsh,oh->bso", jnp.tanh(q + proj_key), we)   # (B,S,1)
    scores = jnp.transpose(scores, (0, 2, 1))                        # (B,1,S)
    scores = jnp.where(mask == 0, -jnp.inf, scores)
    alphas = jax.nn.softmax(scores, axis=-1)
    context = jnp.einsum("bqs,bsd->bqd", alphas, value)
    return context, alphas


if __name__ == "__main__":
    hidden = 32
    key_size = 2 * hidden          # 64  (value feature dim)
    query_size = hidden            # 32
    B, S = 2, 8

    key = jax.random.PRNGKey(0)
    k_q, k_pk, k_v, k_wq, k_we = jax.random.split(key, 5)

    query = jax.random.normal(k_q, (B, 1, query_size), dtype=jnp.float32)
    proj_key = jax.random.normal(k_pk, (B, S, hidden), dtype=jnp.float32)
    value = jax.random.normal(k_v, (B, S, key_size), dtype=jnp.float32)

    # mask: 1 = valid, 0 = padded (batch 0: full length, batch 1: length 5)
    lengths = jnp.array([8, 5])
    mask = (jnp.arange(S)[None, :] < lengths[:, None]).astype(jnp.int32)
    mask = mask[:, None, :]                              # (B, 1, S)

    # deterministic parameter init (Linear weights, no bias)
    wq = 0.1 * jax.random.normal(k_wq, (hidden, query_size), dtype=jnp.float32)
    we = 0.1 * jax.random.normal(k_we, (1, hidden), dtype=jnp.float32)
    # TODO(synk): key_layer (key_size -> hidden) exists in __init__ but is unused
    # in forward (proj_key is assumed pre-projected), so it has no kernel counterpart.

    ctx, alphas = jax.jit(bahdanau_attention)(query, proj_key, value, mask, wq, we)
    jax.block_until_ready((ctx, alphas))

    ctx_ref, alphas_ref = bahdanau_reference(query, proj_key, value, mask, wq, we)
    assert ctx.shape == (B, 1, key_size) and alphas.shape == (B, 1, S)
    assert jnp.allclose(ctx, ctx_ref, atol=1e-5, rtol=1e-5)
    assert jnp.allclose(alphas, alphas_ref, atol=1e-5, rtol=1e-5)

    print("KERNEL_OK")
</pallas_src>

<mosaic_0001>
module attributes {stable_mosaic.version = 11 : i64} {
  func.func @bahdanau_kernel(%arg0: i32, %arg1: memref<8x32xf32, #tpu.memory_space<vmem>>, %arg2: memref<8x8x32xf32, #tpu.memory_space<vmem>>, %arg3: memref<8x8x64xf32, #tpu.memory_space<vmem>>, %arg4: memref<8x8xf32, #tpu.memory_space<vmem>>, %arg5: memref<32x32xf32, #tpu.memory_space<vmem>>, %arg6: memref<1x32xf32, #tpu.memory_space<vmem>>, %arg7: memref<8x64xf32, #tpu.memory_space<vmem>>, %arg8: memref<8x8xf32, #tpu.memory_space<vmem>>) attributes {dimension_semantics = [#tpu.dimension_semantics<parallel>], iteration_bounds = array<i64: 1>, scalar_prefetch = 0 : i64, scratch_operands = 0 : i64, tpu.core_type = #tpu.core_type<tc>, window_params = [{transform_indices = @transform_0, window_bounds = array<i64: 8, 32>}, {transform_indices = @transform_1, window_bounds = array<i64: 8, 8, 32>}, {transform_indices = @transform_2, window_bounds = array<i64: 8, 8, 64>}, {transform_indices = @transform_3, window_bounds = array<i64: 8, 8>}, {pipeline_mode = #tpu.pipeline_mode<synchronous>, transform_indices = @transform_4, window_bounds = array<i64: 32, 32>}, {pipeline_mode = #tpu.pipeline_mode<synchronous>, transform_indices = @transform_5, window_bounds = array<i64: 1, 32>}, {transform_indices = @transform_6, window_bounds = array<i64: 8, 64>}, {transform_indices = @transform_7, window_bounds = array<i64: 8, 8>}]} {
    %c0 = arith.constant 0 : index
    %c0_0 = arith.constant 0 : index
    %0 = vector.load %arg1[%c0, %c0_0] : memref<8x32xf32, #tpu.memory_space<vmem>>, vector<8x32xf32>
    %c0_1 = arith.constant 0 : index
    %c0_2 = arith.constant 0 : index
    %1 = vector.load %arg5[%c0_1, %c0_2] : memref<32x32xf32, #tpu.memory_space<vmem>>, vector<32x32xf32>
    %cst = arith.constant dense<0.000000e+00> : vector<8x32xf32>
    %2 = tpu.matmul %0, %1, %cst {dimension_numbers = #tpu.dot_dimension_numbers<[1], [0], [0], [1], [0, 0, 1, 1], [], []>} : vector<8x32xf32>, vector<32x32xf32>, vector<8x32xf32> -> vector<8x32xf32>
    %3 = vector.shape_cast %2 : vector<8x32xf32> to vector<8x1x32xf32>
    %c0_3 = arith.constant 0 : index
    %c0_4 = arith.constant 0 : index
    %c0_5 = arith.constant 0 : index
    %4 = vector.load %arg2[%c0_3, %c0_4, %c0_5] : memref<8x8x32xf32, #tpu.memory_space<vmem>>, vector<8x8x32xf32>
    %5 = vector.broadcast %3 : vector<8x1x32xf32> to vector<8x8x32xf32>
    %6 = arith.addf %5, %4 : vector<8x8x32xf32>
    %7 = math.tanh %6 : vector<8x8x32xf32>
    %c0_6 = arith.constant 0 : index
    %c0_7 = arith.constant 0 : index
    %8 = vector.load %arg6[%c0_6, %c0_7] : memref<1x32xf32, #tpu.memory_space<vmem>>, vector<1x32xf32>
    %9 = vector.shape_cast %8 : vector<1x32xf32> to vector<1x1x32xf32>
    %10 = vector.broadcast %9 : vector<1x1x32xf32> to vector<8x8x32xf32>
    %11 = arith.mulf %7, %10 : vector<8x8x32xf32>
    %cst_8 = arith.constant dense<0.000000e+00> : vector<8x8xf32>
    %12 = vector.multi_reduction <add>, %11, %cst_8 [2] : vector<8x8x32xf32> to vector<8x8xf32>
    %c0_9 = arith.constant 0 : index
    %c0_10 = arith.constant 0 : index
    %13 = vector.load %arg4[%c0_9, %c0_10] : memref<8x8xf32, #tpu.memory_space<vmem>>, vector<8x8xf32>
    %14 = arith.addf %12, %13 : vector<8x8xf32>
    %cst_11 = arith.constant dense<0xFF800000> : vector<8xf32>
    %15 = vector.multi_reduction <maximumf>, %14, %cst_11 [1] : vector<8x8xf32> to vector<8xf32>
    %16 = vector.shape_cast %15 : vector<8xf32> to vector<8x1xf32>
    %17 = vector.broadcast %16 : vector<8x1xf32> to vector<8x8xf32>
    %18 = arith.subf %14, %17 : vector<8x8xf32>
    %19 = math.exp %18 : vector<8x8xf32>
    %cst_12 = arith.constant dense<0.000000e+00> : vector<8xf32>
    %20 = vector.multi_reduction <add>, %19, %cst_12 [1] : vector<8x8xf32> to vector<8xf32>
    %21 = vector.shape_cast %20 : vector<8xf32> to vector<8x1xf32>
    %22 = tpu.reciprocal %21 : vector<8x1xf32> -> vector<8x1xf32>
    %23 = vector.broadcast %22 : vector<8x1xf32> to vector<8x8xf32>
    %24 = arith.mulf %19, %23 : vector<8x8xf32>
    %25 = vector.shape_cast %24 : vector<8x8xf32> to vector<8x8x1xf32>
    %c0_13 = arith.constant 0 : index
    %c0_14 = arith.constant 0 : index
    %c0_15 = arith.constant 0 : index
    %26 = vector.load %arg3[%c0_13, %c0_14, %c0_15] : memref<8x8x64xf32, #tpu.memory_space<vmem>>, vector<8x8x64xf32>
    %27 = vector.broadcast %25 : vector<8x8x1xf32> to vector<8x8x64xf32>
    %28 = arith.mulf %27, %26 : vector<8x8x64xf32>
    %cst_16 = arith.constant dense<0.000000e+00> : vector<8x64xf32>
    %29 = vector.multi_reduction <add>, %28, %cst_16 [1] : vector<8x8x64xf32> to vector<8x64xf32>
    %c0_17 = arith.constant 0 : index
    %c0_18 = arith.constant 0 : index
    %30 = vector.load %arg7[%c0_17, %c0_18] : memref<8x64xf32, #tpu.memory_space<vmem>>, vector<8x64xf32>
    tpu.vector_store %arg7[%c0_17, %c0_18], %29 {strides = array<i32>} : memref<8x64xf32, #tpu.memory_space<vmem>>, vector<8x64xf32>,
    %c0_19 = arith.constant 0 : index
    %c0_20 = arith.constant 0 : index
    %31 = vector.load %arg8[%c0_19, %c0_20] : memref<8x8xf32, #tpu.memory_space<vmem>>, vector<8x8xf32>
    tpu.vector_store %arg8[%c0_19, %c0_20], %24 {strides = array<i32>} : memref<8x8xf32, #tpu.memory_space<vmem>>, vector<8x8xf32>,
    return
  }
  func.func @transform_0(%arg0: i32) -> (i32, i32) {
    %c0_i32 = arith.constant 0 : i32
    %c0_i32_0 = arith.constant 0 : i32
    return %arg0, %c0_i32 : i32, i32
  }
  func.func @transform_1(%arg0: i32) -> (i32, i32, i32) {
    %c0_i32 = arith.constant 0 : i32
    %c0_i32_0 = arith.constant 0 : i32
    %c0_i32_1 = arith.constant 0 : i32
    return %arg0, %c0_i32, %c0_i32_0 : i32, i32, i32
  }
  func.func @transform_2(%arg0: i32) -> (i32, i32, i32) {
    %c0_i32 = arith.constant 0 : i32
    %c0_i32_0 = arith.constant 0 : i32
    %c0_i32_1 = arith.constant 0 : i32
    return %arg0, %c0_i32, %c0_i32_0 : i32, i32, i32
  }
  func.func @transform_3(%arg0: i32) -> (i32, i32) {
    %c0_i32 = arith.constant 0 : i32
    %c0_i32_0 = arith.constant 0 : i32
    return %arg0, %c0_i32 : i32, i32
  }
  func.func @transform_4(%arg0: i32) -> (i32, i32) {
    %c0_i32 = arith.constant 0 : i32
    %c0_i32_0 = arith.constant 0 : i32
    %c0_i32_1 = arith.constant 0 : i32
    return %c0_i32, %c0_i32_0 : i32, i32
  }
  func.func @transform_5(%arg0: i32) -> (i32, i32) {
    %c0_i32 = arith.constant 0 : i32
    %c0_i32_0 = arith.constant 0 : i32
    %c0_i32_1 = arith.constant 0 : i32
    return %c0_i32, %c0_i32_0 : i32, i32
  }
  func.func @transform_6(%arg0: i32) -> (i32, i32) {
    %c0_i32 = arith.constant 0 : i32
    %c0_i32_0 = arith.constant 0 : i32
    return %arg0, %c0_i32 : i32, i32
  }
  func.func @transform_7(%arg0: i32) -> (i32, i32) {
    %c0_i32 = arith.constant 0 : i32
    %c0_i32_0 = arith.constant 0 : i32
    return %arg0, %c0_i32 : i32, i32
  }
}

</mosaic_0001>

<llo_original>
// kernel: bahdanau_attention.1
$region0: #{bahdanau_attention.1}
  #allocation0 [shape = 'u32[]', space=smem, size = 0x4, offset = 0x4, fixed_abs, tag = 'smem constant byte address 0x4 - core index']
  #allocation1 [shape = 'u32[144,128]{1,0:T(1,128)}', space=vmem, size = 0x12000, scoped, tag = 'internal scratch']
  %s0 = inlined_call_operand.vmem [shape: f32[8,32], index: 0, kind: input, shape index: {}]
  %s1 = inlined_call_operand.vmem [shape: f32[8,8,32], index: 1, kind: input, shape index: {}]
  %s2 = inlined_call_operand.vmem [shape: f32[8,8,64], index: 2, kind: input, shape index: {}]
  %s3 = inlined_call_operand.vmem [shape: f32[8,8], index: 3, kind: input, shape index: {}]
  %s4 = inlined_call_operand.vmem [shape: f32[32,32], index: 4, kind: input, shape index: {}]
  %s5 = inlined_call_operand.vmem [shape: f32[1,32], index: 5, kind: input, shape index: {}]
  %s6 = inlined_call_operand.vmem [shape: f32[8,64], index: 6, kind: output, shape index: {0}]
  %s7 = inlined_call_operand.vmem [shape: f32[8,8], index: 7, kind: output, shape index: {1}]
  %8 = xla_tuple %s6, %s7
  %s9 = sld [smem:[#allocation0]]
  $region42: #{bahdanau_attention.1} parent=0
    _
  %s11 = ssub.s32 1, %s9
  %s12 = scalar_select 0, %s11, %s9
  // Predicated region
  $region2: #{bahdanau_attention.1} parent=0 // pred_check
    _
  $region3: #{bahdanau_attention.1} parent=0 // pred_check_branch
    %14 = sbr.rel (0) target = $region5
  $region4: #{bahdanau_attention.1} parent=0 // pred_region
    _
  $region5: #{bahdanau_attention.1} parent=0 // pred_fallthru
    _
  // Predicated region
  $region6: #{bahdanau_attention.1} parent=0 // pred_check
    _
  $region7: #{bahdanau_attention.1} parent=0 // pred_check_branch
    %16 = sbr.rel (0) target = $region9
  $region8: #{bahdanau_attention.1} parent=0 // pred_region
    _
  $region9: #{bahdanau_attention.1} parent=0 // pred_fallthru
    _
  // Predicated region
  $region10: #{bahdanau_attention.1} parent=0 // pred_check
    _
  $region11: #{bahdanau_attention.1} parent=0 // pred_check_branch
    %18 = sbr.rel (0) target = $region13
  $region12: #{bahdanau_attention.1} parent=0 // pred_region
    _
  $region13: #{bahdanau_attention.1} parent=0 // pred_fallthru
    _
  // Predicated region
  $region14: #{bahdanau_attention.1} parent=0 // pred_check
    _
  $region15: #{bahdanau_attention.1} parent=0 // pred_check_branch
    %20 = sbr.rel (0) target = $region17
  $region16: #{bahdanau_attention.1} parent=0 // pred_region
    _
  $region17: #{bahdanau_attention.1} parent=0 // pred_fallthru
    _
  // Predicated region
  $region18: #{bahdanau_attention.1} parent=0 // pred_check
    _
  $region19: #{bahdanau_attention.1} parent=0 // pred_check_branch
    %22 = sbr.rel (0) target = $region21
  $region20: #{bahdanau_attention.1} parent=0 // pred_region
    _
  $region21: #{bahdanau_attention.1} parent=0 // pred_fallthru
    _
  // Predicated region
  $region22: #{bahdanau_attention.1} parent=0 // pred_check
    _
  $region23: #{bahdanau_attention.1} parent=0 // pred_check_branch
    %24 = sbr.rel (0) target = $region25
  $region24: #{bahdanau_attention.1} parent=0 // pred_region
    _
  $region25: #{bahdanau_attention.1} parent=0 // pred_fallthru
    _
  %v25 = vld [vmem:[%s0] sm:$0xff]
  %v26 = vld [vmem:[%s4] sm:$0xff]
  %v27 = vld [vmem:[%s4 + $0x8] sm:$0xff]
  %v28 = vld [vmem:[%s4 + $0x10] sm:$0xff]
  %v29 = vld [vmem:[%s4 + $0x18] sm:$0xff]
  %vm30 = vcmask 261120
  %v32 = vsel %vm30, %v25, 0
  %34 = vmatprep.subr.mxu0 0.0
  %35 = vmatpush1.msra.mxu0 0.0
  %36 = vmatprep.subr.mxu0 0.0
  %37 = vmatpush1.msra.mxu0 0.0
  %38 = vmatprep.subr.mxu0 0.0
  %39 = vmatpush1.msra.mxu0 0.0
  %40 = vmatprep.subr.mxu0 0.0
  %41 = vmatpush1.msra.mxu0 0.0
  %42 = vmatprep.subr.mxu0 0.0
  %43 = vmatpush1.msra.mxu0 0.0
  %44 = vmatprep.subr.mxu0 0.0
  %45 = vmatpush1.msra.mxu0 0.0
  %46 = vmatprep.subr.mxu0 0.0
  %47 = vmatpush1.msra.mxu0 0.0
  %48 = vmatprep.subr.mxu0 0.0
  %49 = vmatpush1.msra.mxu0 0.0
  %50 = vmatprep.subr.mxu0 0.0
  %51 = vmatpush1.msra.mxu0 0.0
  %52 = vmatprep.subr.mxu0 0.0
  %53 = vmatpush1.msra.mxu0 0.0
  %54 = vmatprep.subr.mxu0 0.0
  %55 = vmatpush1.msra.mxu0 0.0
  %56 = vmatprep.subr.mxu0 0.0
  %57 = vmatpush1.msra.mxu0 0.0
  %58 = vmatprep.subr.mxu0 0.0
  %59 = vmatpush1.msra.mxu0 %v29
  %60 = vmatprep.subr.mxu0 0.0
  %61 = vmatpush1.msra.mxu0 %v28
  %62 = vmatprep.subr.mxu0 0.0
  %63 = vmatpush1.msra.mxu0 %v27
  %64 = vmatprep.subr.mxu0 0.0
  %65 = vmatpush1.msra.mxu0 %v26
  %66 = vmatprep.subr.mxu0 0.0
  %67 = vmatpush2.msra.mxu0 0.0
  %68 = vmatprep.subr.mxu0 0.0
  %69 = vmatpush2.msra.mxu0 0.0
  %70 = vmatprep.subr.mxu0 0.0
  %71 = vmatpush2.msra.mxu0 0.0
  %72 = vmatprep.subr.mxu0 0.0
  %73 = vmatpush2.msra.mxu0 0.0
  %74 = vmatprep.subr.mxu0 0.0
  %75 = vmatpush2.msra.mxu0 0.0
  %76 = vmatprep.subr.mxu0 0.0
  %77 = vmatpush2.msra.mxu0 0.0
  %78 = vmatprep.subr.mxu0 0.0
  %79 = vmatpush2.msra.mxu0 0.0
  %80 = vmatprep.subr.mxu0 0.0
  %81 = vmatpush2.msra.mxu0 0.0
  %82 = vmatprep.subr.mxu0 0.0
  %83 = vmatpush2.msra.mxu0 0.0
  %84 = vmatprep.subr.mxu0 0.0
  %85 = vmatpush2.msra.mxu0 0.0
  %86 = vmatprep.subr.mxu0 0.0
  %87 = vmatpush2.msra.mxu0 0.0
  %88 = vmatprep.subr.mxu0 0.0
  %89 = vmatpush2.msra.mxu0 0.0
  %90 = vmatprep.subr.mxu0 0.0
  %91 = vmatpush2.msra.mxu0 0.0
  %92 = vmatprep.subr.mxu0 0.0
  %93 = vmatpush2.msra.mxu0 0.0
  %94 = vmatprep.subr.mxu0 0.0
  %95 = vmatpush2.msra.mxu0 0.0
  %96 = vmatprep.subr.mxu0 0.0
  %97 = vmatpush2.msra.mxu0 0.0
  %98 = vmatprep.mubr.f32.mxu0 0.0
  %99 = vmatmul.mubr.f32.gmra.mxu0 %v32
  %v100 = vpop.f32.mrf.mxu0
  %v101 = vadd.f32 0.0, %v100
  %v102 = vpop.f32.mrf.mxu0
  %103 = vdwg.mxu0
  %v105 = vcombine.high %v101, %v101
  %v107 = vunpack.c.l.s4 1966171168
  %v108 = vunpack.c.0.s8 %v107
  %v109 = vlaneseq
  %v110 = vshrl.u32 %v109, 7
  %v111 = vsub.s32 %v108, %v110
  %v112 = vrot.slane %v101, %v111
  %v114 = vunpack.c.l.s4 1966171168
  %v115 = vunpack.c.0.s8 %v114
  %v116 = vlaneseq
  %v117 = vshrl.u32 %v116, 7
  %v118 = vsub.s32 %v115, %v117
  %v119 = vrot.slane %v105, %v118
  %v120 = vcombine.high %v112, %v112
  %v121 = vcombine.high %v119, %v119
  %v123 = vunpack.c.l.s4 1966171168
  %v124 = vunpack.c.0.s8 %v123
  %v125 = vlaneseq
  %v126 = vshrl.u32 %v125, 7
  %v127 = vsub.s32 %v124, %v126
  %v128 = vrot.slane %v112, %v127
  %v130 = vunpack.c.l.s4 1966171168
  %v131 = vunpack.c.0.s8 %v130
  %v132 = vlaneseq
  %v133 = vshrl.u32 %v132, 7
  %v134 = vsub.s32 %v131, %v133
  %v135 = vrot.slane %v119, %v134
  %v137 = vunpack.c.l.s4 1966171168
  %v138 = vunpack.c.0.s8 %v137
  %v139 = vlaneseq
  %v140 = vshrl.u32 %v139, 7
  %v141 = vsub.s32 %v138, %v140
  %v142 = vrot.slane %v120, %v141
  %v144 = vunpack.c.l.s4 1966171168
  %v145 = vunpack.c.0.s8 %v144
  %v146 = vlaneseq
  %v147 = vshrl.u32 %v146, 7
  %v148 = vsub.s32 %v145, %v147
  %v149 = vrot.slane %v121, %v148
  %v150 = vcombine.high %v128, %v128
  %v151 = vcombine.high %v135, %v135
  %v152 = vcombine.high %v142, %v142
  %v153 = vcombine.high %v149, %v149
  %v154 = vld [vmem:[%s1] sm:$0xff]
  %v155 = vld [vmem:[%s1 + $0x8] sm:$0xff]
  %v156 = vld [vmem:[%s1 + $0x10] sm:$0xff]
  %v157 = vld [vmem:[%s1 + $0x18] sm:$0xff]
  %v158 = vld [vmem:[%s1 + $0x20] sm:$0xff]
  %v159 = vld [vmem:[%s1 + $0x28] sm:$0xff]
  %v160 = vld [vmem:[%s1 + $0x30] sm:$0xff]
  %v161 = vld [vmem:[%s1 + $0x38] sm:$0xff]
  %v162 = vlaneseq
  %v163 = vshrl.u32 %v162, 7
  %v164 = vsub.s32 0, %v163
  %v165 = vrot.slane %v128, %v164
  %v166 = vlaneseq
  %v167 = vshrl.u32 %v166, 7
  %v168 = vsub.s32 0, %v167
  %v169 = vrot.slane %v142, %v168
  %v170 = vlaneseq
  %v171 = vshrl.u32 %v170, 7
  %v172 = vsub.s32 0, %v171
  %v173 = vrot.slane %v150, %v172
  %v174 = vlaneseq
  %v175 = vshrl.u32 %v174, 7
  %v176 = vsub.s32 0, %v175
  %v177 = vrot.slane %v152, %v176
  %v178 = vlaneseq
  %v179 = vshrl.u32 %v178, 7
  %v180 = vsub.s32 0, %v179
  %v181 = vrot.slane %v135, %v180
  %v182 = vlaneseq
  %v183 = vshrl.u32 %v182, 7
  %v184 = vsub.s32 0, %v183
  %v185 = vrot.slane %v149, %v184
  %v186 = vlaneseq
  %v187 = vshrl.u32 %v186, 7
  %v188 = vsub.s32 0, %v187
  %v189 = vrot.slane %v151, %v188
  %v190 = vlaneseq
  %v191 = vshrl.u32 %v190, 7
  %v192 = vsub.s32 0, %v191
  %v193 = vrot.slane %v153, %v192
  %v202 = vadd.f32 %v165, %v154
  %v203 = vadd.f32 %v169, %v155
  %v204 = vadd.f32 %v173, %v156
  %v205 = vadd.f32 %v177, %v157
  %v206 = vadd.f32 %v181, %v158
  %v207 = vadd.f32 %v185, %v159
  %v208 = vadd.f32 %v189, %v160
  %v209 = vadd.f32 %v193, %v161
  %v210 = vtanh.pop %v202
  %v211 = vtanh.pop %v203
  %v212 = vtanh.pop %v204
  %v213 = vtanh.pop %v205
  %v214 = vtanh.pop %v206
  %v215 = vtanh.pop %v207
  %v216 = vtanh.pop %v208
  %v217 = vtanh.pop %v209
  %v218 = vld [vmem:[%s5] sm:$0x1]
  %v220 = vlaneseq
  %v221 = vshrl.u32 %v220, 7
  %v222 = vsub.s32 0, %v221
  %v223 = vrot.slane %v218, %v222
  %v225 = vmul.f32 %v210, %v223
  %v226 = vmul.f32 %v211, %v223
  %v227 = vmul.f32 %v212, %v223
  %v228 = vmul.f32 %v213, %v223
  %v229 = vmul.f32 %v214, %v223
  %v230 = vmul.f32 %v215, %v223
  %v231 = vmul.f32 %v216, %v223
  %v232 = vmul.f32 %v217, %v223
  %v233 = vsel %vm30, %v225, 0.0
  %234 = vadd.xlane.f32.xlu0 %v233
  %v235 = vpop.xlane.xlu0 %234
  %v236 = vsel %vm30, %v226, 0.0
  %237 = vadd.xlane.f32.xlu0 %v236
  %v238 = vpop.xlane.xlu0 %237
  %v239 = vsel %vm30, %v227, 0.0
  %240 = vadd.xlane.f32.xlu0 %v239
  %v241 = vpop.xlane.xlu0 %240
  %v242 = vsel %vm30, %v228, 0.0
  %243 = vadd.xlane.f32.xlu0 %v242
  %v244 = vpop.xlane.xlu0 %243
  %v245 = vsel %vm30, %v229, 0.0
  %246 = vadd.xlane.f32.xlu0 %v245
  %v247 = vpop.xlane.xlu0 %246
  %v248 = vsel %vm30, %v230, 0.0
  %249 = vadd.xlane.f32.xlu0 %v248
  %v250 = vpop.xlane.xlu0 %249
  %v251 = vsel %vm30, %v231, 0.0
  %252 = vadd.xlane.f32.xlu0 %v251
  %v253 = vpop.xlane.xlu0 %252
  %v254 = vsel %vm30, %v232, 0.0
  %255 = vadd.xlane.f32.xlu0 %v254
  %v256 = vpop.xlane.xlu0 %255
  %v257 = vld [vmem:[%s3] sm:$0xff]
  %v259 = vlaneseq
  %v260 = vshrl.u32 %v259, 7
  %v261 = vsub.s32 0, %v260
  %v262 = vrot.slane %v257, %v261
  %264 = vbcast.lane.b32.xlu0 %v262, 256
  %v265 = vpop.permute.xlu0 %264
  %v266 = vlaneseq
  %v267 = vshrl.u32 %v266, 7
  %v268 = vsub.s32 1, %v267
  %v269 = vrot.slane %v257, %v268
  %271 = vbcast.lane.b32.xlu0 %v269, 256
  %v272 = vpop.permute.xlu0 %271
  %v273 = vlaneseq
  %v274 = vshrl.u32 %v273, 7
  %v275 = vsub.s32 2, %v274
  %v276 = vrot.slane %v257, %v275
  %278 = vbcast.lane.b32.xlu0 %v276, 256
  %v279 = vpop.permute.xlu0 %278
  %v280 = vlaneseq
  %v281 = vshrl.u32 %v280, 7
  %v282 = vsub.s32 3, %v281
  %v283 = vrot.slane %v257, %v282
  %285 = vbcast.lane.b32.xlu0 %v283, 256
  %v286 = vpop.permute.xlu0 %285
  %v287 = vlaneseq
  %v288 = vshrl.u32 %v287, 7
  %v289 = vsub.s32 4, %v288
  %v290 = vrot.slane %v257, %v289
  %292 = vbcast.lane.b32.xlu0 %v290, 256
  %v293 = vpop.permute.xlu0 %292
  %v294 = vlaneseq
  %v295 = vshrl.u32 %v294, 7
  %v296 = vsub.s32 5, %v295
  %v297 = vrot.slane %v257, %v296
  %299 = vbcast.lane.b32.xlu0 %v297, 256
  %v300 = vpop.permute.xlu0 %299
  %v301 = vlaneseq
  %v302 = vshrl.u32 %v301, 7
  %v303 = vsub.s32 6, %v302
  %v304 = vrot.slane %v257, %v303
  %306 = vbcast.lane.b32.xlu0 %v304, 256
  %v307 = vpop.permute.xlu0 %306
  %v308 = vlaneseq
  %v309 = vshrl.u32 %v308, 7
  %v310 = vsub.s32 7, %v309
  %v311 = vrot.slane %v257, %v310
  %313 = vbcast.lane.b32.xlu0 %v311, 256
  %v314 = vpop.permute.xlu0 %313
  %v323 = vadd.f32 %v235, %v265
  %v324 = vadd.f32 %v238, %v272
  %v325 = vadd.f32 %v241, %v279
  %v326 = vadd.f32 %v244, %v286
  %v327 = vadd.f32 %v247, %v293
  %v328 = vadd.f32 %v250, %v300
  %v329 = vadd.f32 %v253, %v307
  %v330 = vadd.f32 %v256, %v314
  %339 = vset.pattern.permute.xlu0 0
  %340 = vperm.xlu0 %339, %v323
  %v341 = vpop.permute.xlu0 %340
  %342 = vset.pattern.permute.xlu0 0
  %343 = vperm.xlu0 %342, %v324
  %v344 = vpop.permute.xlu0 %343
  %345 = vset.pattern.permute.xlu0 0
  %346 = vperm.xlu0 %345, %v325
  %v347 = vpop.permute.xlu0 %346
  %348 = vset.pattern.permute.xlu0 0
  %349 = vperm.xlu0 %348, %v326
  %v350 = vpop.permute.xlu0 %349
  %351 = vset.pattern.permute.xlu0 0
  %352 = vperm.xlu0 %351, %v327
  %v353 = vpop.permute.xlu0 %352
  %354 = vset.pattern.permute.xlu0 0
  %355 = vperm.xlu0 %354, %v328
  %v356 = vpop.permute.xlu0 %355
  %357 = vset.pattern.permute.xlu0 0
  %358 = vperm.xlu0 %357, %v329
  %v359 = vpop.permute.xlu0 %358
  %360 = vset.pattern.permute.xlu0 0
  %361 = vperm.xlu0 %360, %v330
  %v362 = vpop.permute.xlu0 %361
  %v363 = vlaneseq
  %v364 = vand.u32 %v363, 127
  %v365 = vlaneseq
  %v366 = vshrl.u32 %v365, 7
  %v367 = vsub.s32 %v364, %v366
  %v368 = vrot.slane %v341, %v367
  %v369 = vlaneseq
  %v370 = vshrl.u32 %v369, 7
  %v371 = vsub.s32 %v364, %v370
  %v372 = vrot.slane %v344, %v371
  %v373 = vlaneseq
  %v374 = vshrl.u32 %v373, 7
  %v375 = vsub.s32 %v364, %v374
  %v376 = vrot.slane %v347, %v375
  %v377 = vlaneseq
  %v378 = vshrl.u32 %v377, 7
  %v379 = vsub.s32 %v364, %v378
  %v380 = vrot.slane %v350, %v379
  %v381 = vlaneseq
  %v382 = vshrl.u32 %v381, 7
  %v383 = vsub.s32 %v364, %v382
  %v384 = vrot.slane %v353, %v383
  %v385 = vlaneseq
  %v386 = vshrl.u32 %v385, 7
  %v387 = vsub.s32 %v364, %v386
  %v388 = vrot.slane %v356, %v387
  %v389 = vlaneseq
  %v390 = vshrl.u32 %v389, 7
  %v391 = vsub.s32 %v364, %v390
  %v392 = vrot.slane %v359, %v391
  %v393 = vlaneseq
  %v394 = vshrl.u32 %v393, 7
  %v395 = vsub.s32 %v364, %v394
  %v396 = vrot.slane %v362, %v395
  %vm397 = vcmask 1041409
  %v398 = vsel %vm397, %v372, %v368
  %vm399 = vcmask 1042434
  %v400 = vsel %vm399, %v376, %v398
  %vm401 = vcmask 1043459
  %v402 = vsel %vm401, %v380, %v400
  %vm403 = vcmask 1044484
  %v404 = vsel %vm403, %v384, %v402
  %vm405 = vcmask 1045509
  %v406 = vsel %vm405, %v388, %v404
  %vm407 = vcmask 1046534
  %v408 = vsel %vm407, %v392, %v406
  %vm409 = vcmask 1047559
  %v410 = vsel %vm409, %v396, %v408
  %vm412 = vcmask 64512
  %v413 = vsel %vm412, %v410, -inf
  %414 = vmax.xlane.f32.xlu0 %v413
  %v415 = vpop.xlane.xlu0 %414
  %v417 = vlaneseq
  %v418 = vshrl.u32 %v417, 7
  %v419 = vsub.s32 0, %v418
  %v420 = vrot.slane %v415, %v419
  %v421 = vlaneseq
  %v422 = vshrl.u32 %v421, 7
  %v423 = vsub.s32 1, %v422
  %v424 = vrot.slane %v415, %v423
  %v425 = vlaneseq
  %v426 = vshrl.u32 %v425, 7
  %v427 = vsub.s32 2, %v426
  %v428 = vrot.slane %v415, %v427
  %v429 = vlaneseq
  %v430 = vshrl.u32 %v429, 7
  %v431 = vsub.s32 3, %v430
  %v432 = vrot.slane %v415, %v431
  %v433 = vlaneseq
  %v434 = vshrl.u32 %v433, 7
  %v435 = vsub.s32 4, %v434
  %v436 = vrot.slane %v415, %v435
  %v437 = vlaneseq
  %v438 = vshrl.u32 %v437, 7
  %v439 = vsub.s32 5, %v438
  %v440 = vrot.slane %v415, %v439
  %v441 = vlaneseq
  %v442 = vshrl.u32 %v441, 7
  %v443 = vsub.s32 6, %v442
  %v444 = vrot.slane %v415, %v443
  %v445 = vlaneseq
  %v446 = vshrl.u32 %v445, 7
  %v447 = vsub.s32 7, %v446
  %v448 = vrot.slane %v415, %v447
  %v457 = vsub.f32 %v323, %v420
  %v458 = vsub.f32 %v324, %v424
  %v459 = vsub.f32 %v325, %v428
  %v460 = vsub.f32 %v326, %v432
  %v461 = vsub.f32 %v327, %v436
  %v462 = vsub.f32 %v328, %v440
  %v463 = vsub.f32 %v329, %v444
  %v464 = vsub.f32 %v330, %v448
  %v465 = vmul.f32 %v457, 1.442695
  %v466 = vpow.pop %v465
  %v467 = vmul.f32 %v458, 1.442695
  %v468 = vpow.pop %v467
  %v469 = vmul.f32 %v459, 1.442695
  %v470 = vpow.pop %v469
  %v471 = vmul.f32 %v460, 1.442695
  %v472 = vpow.pop %v471
  %v473 = vmul.f32 %v461, 1.442695
  %v474 = vpow.pop %v473
  %v475 = vmul.f32 %v462, 1.442695
  %v476 = vpow.pop %v475
  %v477 = vmul.f32 %v463, 1.442695
  %v478 = vpow.pop %v477
  %v479 = vmul.f32 %v464, 1.442695
  %v480 = vpow.pop %v479
  %489 = vset.pattern.permute.xlu0 0
  %490 = vperm.xlu0 %489, %v466
  %v491 = vpop.permute.xlu0 %490
  %492 = vset.pattern.permute.xlu0 0
  %493 = vperm.xlu0 %492, %v468
  %v494 = vpop.permute.xlu0 %493
  %495 = vset.pattern.permute.xlu0 0
  %496 = vperm.xlu0 %495, %v470
  %v497 = vpop.permute.xlu0 %496
  %498 = vset.pattern.permute.xlu0 0
  %499 = vperm.xlu0 %498, %v472
  %v500 = vpop.permute.xlu0 %499
  %501 = vset.pattern.permute.xlu0 0
  %502 = vperm.xlu0 %501, %v474
  %v503 = vpop.permute.xlu0 %502
  %504 = vset.pattern.permute.xlu0 0
  %505 = vperm.xlu0 %504, %v476
  %v506 = vpop.permute.xlu0 %505
  %507 = vset.pattern.permute.xlu0 0
  %508 = vperm.xlu0 %507, %v478
  %v509 = vpop.permute.xlu0 %508
  %510 = vset.pattern.permute.xlu0 0
  %511 = vperm.xlu0 %510, %v480
  %v512 = vpop.permute.xlu0 %511
  %v513 = vlaneseq
  %v514 = vshrl.u32 %v513, 7
  %v515 = vsub.s32 %v364, %v514
  %v516 = vrot.slane %v491, %v515
  %v517 = vlaneseq
  %v518 = vshrl.u32 %v517, 7
  %v519 = vsub.s32 %v364, %v518
  %v520 = vrot.slane %v494, %v519
  %v521 = vlaneseq
  %v522 = vshrl.u32 %v521, 7
  %v523 = vsub.s32 %v364, %v522
  %v524 = vrot.slane %v497, %v523
  %v525 = vlaneseq
  %v526 = vshrl.u32 %v525, 7
  %v527 = vsub.s32 %v364, %v526
  %v528 = vrot.slane %v500, %v527
  %v529 = vlaneseq
  %v530 = vshrl.u32 %v529, 7
  %v531 = vsub.s32 %v364, %v530
  %v532 = vrot.slane %v503, %v531
  %v533 = vlaneseq
  %v534 = vshrl.u32 %v533, 7
  %v535 = vsub.s32 %v364, %v534
  %v536 = vrot.slane %v506, %v535
  %v537 = vlaneseq
  %v538 = vshrl.u32 %v537, 7
  %v539 = vsub.s32 %v364, %v538
  %v540 = vrot.slane %v509, %v539
  %v541 = vlaneseq
  %v542 = vshrl.u32 %v541, 7
  %v543 = vsub.s32 %v364, %v542
  %v544 = vrot.slane %v512, %v543
  %v545 = vsel %vm397, %v520, %v516
  %v546 = vsel %vm399, %v524, %v545
  %v547 = vsel %vm401, %v528, %v546
  %v548 = vsel %vm403, %v532, %v547
  %v549 = vsel %vm405, %v536, %v548
  %v550 = vsel %vm407, %v540, %v549
  %v551 = vsel %vm409, %v544, %v550
  %v553 = vsel %vm412, %v551, 0.0
  %554 = vadd.xlane.f32.xlu0 %v553
  %v555 = vpop.xlane.xlu0 %554
  %v556 = vrcp.pop %v555
  %v558 = vlaneseq
  %v559 = vshrl.u32 %v558, 7
  %v560 = vsub.s32 0, %v559
  %v561 = vrot.slane %v556, %v560
  %v562 = vlaneseq
  %v563 = vshrl.u32 %v562, 7
  %v564 = vsub.s32 1, %v563
  %v565 = vrot.slane %v556, %v564
  %v566 = vlaneseq
  %v567 = vshrl.u32 %v566, 7
  %v568 = vsub.s32 2, %v567
  %v569 = vrot.slane %v556, %v568
  %v570 = vlaneseq
  %v571 = vshrl.u32 %v570, 7
  %v572 = vsub.s32 3, %v571
  %v573 = vrot.slane %v556, %v572
  %v574 = vlaneseq
  %v575 = vshrl.u32 %v574, 7
  %v576 = vsub.s32 4, %v575
  %v577 = vrot.slane %v556, %v576
  %v578 = vlaneseq
  %v579 = vshrl.u32 %v578, 7
  %v580 = vsub.s32 5, %v579
  %v581 = vrot.slane %v556, %v580
  %v582 = vlaneseq
  %v583 = vshrl.u32 %v582, 7
  %v584 = vsub.s32 6, %v583
  %v585 = vrot.slane %v556, %v584
  %v586 = vlaneseq
  %v587 = vshrl.u32 %v586, 7
  %v588 = vsub.s32 7, %v587
  %v589 = vrot.slane %v556, %v588
  %v598 = vmul.f32 %v466, %v561
  %v599 = vmul.f32 %v468, %v565
  %v600 = vmul.f32 %v470, %v569
  %v601 = vmul.f32 %v472, %v573
  %v602 = vmul.f32 %v474, %v577
  %v603 = vmul.f32 %v476, %v581
  %v604 = vmul.f32 %v478, %v585
  %v605 = vmul.f32 %v480, %v589
  %v606 = vld [vmem:[%s2] sm:$0xff]
  %v607 = vld [vmem:[%s2 + $0x8] sm:$0xff]
  %v608 = vld [vmem:[%s2 + $0x10] sm:$0xff]
  %v609 = vld [vmem:[%s2 + $0x18] sm:$0xff]
  %v610 = vld [vmem:[%s2 + $0x20] sm:$0xff]
  %v611 = vld [vmem:[%s2 + $0x28] sm:$0xff]
  %v612 = vld [vmem:[%s2 + $0x30] sm:$0xff]
  %v613 = vld [vmem:[%s2 + $0x38] sm:$0xff]
  %615 = vset.pattern.permute.xlu0 0
  %616 = vperm.xlu0 %615, %v598
  %v617 = vpop.permute.xlu0 %616
  %620 = vset.pattern.permute.xlu0 0
  %621 = vperm.xlu0 %620, %v599
  %v622 = vpop.permute.xlu0 %621
  %625 = vset.pattern.permute.xlu0 0
  %626 = vperm.xlu0 %625, %v600
  %v627 = vpop.permute.xlu0 %626
  %630 = vset.pattern.permute.xlu0 0
  %631 = vperm.xlu0 %630, %v601
  %v632 = vpop.permute.xlu0 %631
  %635 = vset.pattern.permute.xlu0 0
  %636 = vperm.xlu0 %635, %v602
  %v637 = vpop.permute.xlu0 %636
  %640 = vset.pattern.permute.xlu0 0
  %641 = vperm.xlu0 %640, %v603
  %v642 = vpop.permute.xlu0 %641
  %645 = vset.pattern.permute.xlu0 0
  %646 = vperm.xlu0 %645, %v604
  %v647 = vpop.permute.xlu0 %646
  %650 = vset.pattern.permute.xlu0 0
  %651 = vperm.xlu0 %650, %v605
  %v652 = vpop.permute.xlu0 %651
  %v654 = vmul.f32 %v617, %v606
  %v655 = vmul.f32 %v622, %v607
  %v656 = vmul.f32 %v627, %v608
  %v657 = vmul.f32 %v632, %v609
  %v658 = vmul.f32 %v637, %v610
  %v659 = vmul.f32 %v642, %v611
  %v660 = vmul.f32 %v647, %v612
  %v661 = vmul.f32 %v652, %v613
  %vm662 = vcmask 523264
  %v663 = vsel %vm662, %v654, 0.0
  %v664 = vrot.slane %v663, 4
  %v665 = vadd.f32 %v663, %v664
  %v666 = vrot.slane %v665, 2
  %v667 = vadd.f32 %v665, %v666
  %v668 = vrot.slane %v667, 1
  %v669 = vadd.f32 %v667, %v668
  %v670 = vsel %vm662, %v655, 0.0
  %v671 = vrot.slane %v670, 4
  %v672 = vadd.f32 %v670, %v671
  %v673 = vrot.slane %v672, 2
  %v674 = vadd.f32 %v672, %v673
  %v675 = vrot.slane %v674, 1
  %v676 = vadd.f32 %v674, %v675
  %v677 = vsel %vm662, %v656, 0.0
  %v678 = vrot.slane %v677, 4
  %v679 = vadd.f32 %v677, %v678
  %v680 = vrot.slane %v679, 2
  %v681 = vadd.f32 %v679, %v680
  %v682 = vrot.slane %v681, 1
  %v683 = vadd.f32 %v681, %v682
  %v684 = vsel %vm662, %v657, 0.0
  %v685 = vrot.slane %v684, 4
  %v686 = vadd.f32 %v684, %v685
  %v687 = vrot.slane %v686, 2
  %v688 = vadd.f32 %v686, %v687
  %v689 = vrot.slane %v688, 1
  %v690 = vadd.f32 %v688, %v689
  %v691 = vsel %vm662, %v658, 0.0
  %v692 = vrot.slane %v691, 4
  %v693 = vadd.f32 %v691, %v692
  %v694 = vrot.slane %v693, 2
  %v695 = vadd.f32 %v693, %v694
  %v696 = vrot.slane %v695, 1
  %v697 = vadd.f32 %v695, %v696
  %v698 = vsel %vm662, %v659, 0.0
  %v699 = vrot.slane %v698, 4
  %v700 = vadd.f32 %v698, %v699
  %v701 = vrot.slane %v700, 2
  %v702 = vadd.f32 %v700, %v701
  %v703 = vrot.slane %v702, 1
  %v704 = vadd.f32 %v702, %v703
  %v705 = vsel %vm662, %v660, 0.0
  %v706 = vrot.slane %v705, 4
  %v707 = vadd.f32 %v705, %v706
  %v708 = vrot.slane %v707, 2
  %v709 = vadd.f32 %v707, %v708
  %v710 = vrot.slane %v709, 1
  %v711 = vadd.f32 %v709, %v710
  %v712 = vsel %vm662, %v661, 0.0
  %v713 = vrot.slane %v712, 4
  %v714 = vadd.f32 %v712, %v713
  %v715 = vrot.slane %v714, 2
  %v716 = vadd.f32 %v714, %v715
  %v717 = vrot.slane %v716, 1
  %v718 = vadd.f32 %v716, %v717
  %v727 = vsel %vm397, %v676, %v669
  %v728 = vsel %vm399, %v683, %v727
  %v729 = vsel %vm401, %v690, %v728
  %v730 = vsel %vm403, %v697, %v729
  %v731 = vsel %vm405, %v704, %v730
  %v732 = vsel %vm407, %v711, %v731
  %v733 = vsel %vm409, %v718, %v732
  %735 = vst.msk [vmem:[%s6] sm:$0xff] %vm662, %v733
  %v736 = vlaneseq
  %v737 = vshrl.u32 %v736, 7
  %v738 = vsub.s32 %v364, %v737
  %v739 = vrot.slane %v617, %v738
  %v740 = vlaneseq
  %v741 = vshrl.u32 %v740, 7
  %v742 = vsub.s32 %v364, %v741
  %v743 = vrot.slane %v622, %v742
  %v744 = vlaneseq
  %v745 = vshrl.u32 %v744, 7
  %v746 = vsub.s32 %v364, %v745
  %v747 = vrot.slane %v627, %v746
  %v748 = vlaneseq
  %v749 = vshrl.u32 %v748, 7
  %v750 = vsub.s32 %v364, %v749
  %v751 = vrot.slane %v632, %v750
  %v752 = vlaneseq
  %v753 = vshrl.u32 %v752, 7
  %v754 = vsub.s32 %v364, %v753
  %v755 = vrot.slane %v637, %v754
  %v756 = vlaneseq
  %v757 = vshrl.u32 %v756, 7
  %v758 = vsub.s32 %v364, %v757
  %v759 = vrot.slane %v642, %v758
  %v760 = vlaneseq
  %v761 = vshrl.u32 %v760, 7
  %v762 = vsub.s32 %v364, %v761
  %v763 = vrot.slane %v647, %v762
  %v764 = vlaneseq
  %v765 = vshrl.u32 %v764, 7
  %v766 = vsub.s32 %v364, %v765
  %v767 = vrot.slane %v652, %v766
  %v768 = vsel %vm397, %v743, %v739
  %v769 = vsel %vm399, %v747, %v768
  %v770 = vsel %vm401, %v751, %v769
  %v771 = vsel %vm403, %v755, %v770
  %v772 = vsel %vm405, %v759, %v771
  %v773 = vsel %vm407, %v763, %v772
  %v774 = vsel %vm409, %v767, %v773
  %776 = vst.msk [vmem:[%s7] sm:$0xff] %vm412, %v774
  // Predicated region
  $region26: #{bahdanau_attention.1} parent=0 // pred_check
    _
  $region27: #{bahdanau_attention.1} parent=0 // pred_check_branch
    %778 = sbr.rel (0) target = $region29
  $region28: #{bahdanau_attention.1} parent=0 // pred_region
    _
  $region29: #{bahdanau_attention.1} parent=0 // pred_fallthru
    _
  // Predicated region
  $region30: #{bahdanau_attention.1} parent=0 // pred_check
    _
  $region31: #{bahdanau_attention.1} parent=0 // pred_check_branch
    %780 = sbr.rel (0) target = $region33
  $region32: #{bahdanau_attention.1} parent=0 // pred_region
    _
  $region33: #{bahdanau_attention.1} parent=0 // pred_fallthru
    _
  // Predicated region
  $region34: #{bahdanau_attention.1} parent=0 // pred_check
    _
  $region35: #{bahdanau_attention.1} parent=0 // pred_check_branch
    %782 = sbr.rel (0) target = $region37
  $region36: #{bahdanau_attention.1} parent=0 // pred_region
    _
  $region37: #{bahdanau_attention.1} parent=0 // pred_fallthru
    _
  // Predicated region
  $region38: #{bahdanau_attention.1} parent=0 // pred_check
    _
  $region39: #{bahdanau_attention.1} parent=0 // pred_check_branch
    %784 = sbr.rel (0) target = $region41
  $region40: #{bahdanau_attention.1} parent=0 // pred_region
    _
  $region41: #{bahdanau_attention.1} parent=0 // pred_fallthru
    _

</llo_original>
